<compile_context>
chip_gen: v6e
topology: v6e:2x2x1
jax: 0.10.0
libtpu: 0.0.40
codegen_flags: <defaults>
</compile_context>

<pallas_src>
import jax
import jax.numpy as jnp
from jax import lax
from jax.experimental import pallas as pl
from jax.experimental.pallas import tpu as pltpu

EPS = 1e-5
# MXU operands are fed as bf16 (f32 accumulation).  Set to jnp.float32 to
# recover <=1e-4 agreement with the pure-f32 reference.
MXU_DTYPE = jnp.bfloat16


# ----------------------------- small helpers -------------------------------- #

def _const_spec(shape):
    """Whole-array block with constant index_map: VMEM-resident, no re-DMA."""
    return pl.BlockSpec(shape, lambda *_: (0,) * len(shape))


_VMEM_BUDGET = None


def _vmem_budget_bytes():
    """Generation-aware VMEM budget (~3/4 of physical per-core VMEM):
    ~48 MiB on v7x (64 MiB physical), ~96 MiB on v5e/v6e (128 MiB physical)."""
    global _VMEM_BUDGET
    if _VMEM_BUDGET is None:
        cap = 64 * 1024 * 1024
        try:
            cap = int(getattr(pltpu.get_tpu_info(), "vmem_capacity_bytes", cap)) or cap
        except Exception:
            pass
        budget = (3 * cap) // 4
        _VMEM_BUDGET = max(32 * 1024 * 1024, min(budget, 112 * 1024 * 1024))
    return _VMEM_BUDGET


def _pick_row_tile(n_rows, bytes_per_row, vmem_budget, unit=8,
                   min_steps=4, max_rows=1024):
    """Largest row tile that (a) is a multiple of `unit` sublanes, (b) divides
    n_rows exactly (no padded rows polluting BN stats), (c) keeps the
    double-buffered blocks inside the VMEM budget, and (d) leaves >= min_steps
    grid steps for DMA/compute overlap when possible."""
    if n_rows % unit:
        return n_rows                                  # tiny/odd case: one block
    k_total = n_rows // unit
    divisors = [k for k in range(1, k_total + 1) if k_total % k == 0]

    def fits(k):
        tm = k * unit
        return tm <= max_rows and 2 * tm * bytes_per_row <= vmem_budget

    pipelined = [k for k in divisors if fits(k) and k_total // k >= min_steps]
    if pipelined:
        return max(pipelined) * unit
    fitting = [k for k in divisors if fits(k)]
    return (max(fitting) if fitting else 1) * unit


# ----------------- kernel 1: bn1 -> relu -> conv1 (+ BN2 partials) ---------- #

def pre_kernel(x_ref, sc1_ref, sh1_ref, w1_ref, t_ref, st_ref):
    # relu(bn1(x)) as a single per-channel FMA (scale/shift folded in glue).
    a = jnp.maximum(x_ref[...] * sc1_ref[...] + sh1_ref[...], 0.0)
    # conv1 (1x1) = channel matmul; bf16 operands, f32 accumulation on the MXU.
    t = jnp.dot(a.astype(MXU_DTYPE), w1_ref[...],
                preferred_element_type=jnp.float32)
    t_ref[...] = t
    # Per-tile BN2 partial sums (reduced in glue) -> no cross-step state, so
    # the grid stays "parallel".  Two row stores, no sublane concat.
    st_ref[0, 0:1, :] = jnp.sum(t, axis=0, keepdims=True)
    st_ref[0, 1:2, :] = jnp.sum(t * t, axis=0, keepdims=True)


def _call_pre(x2, sc1, sh1, w1, vmem_budget):
    M, Cin = x2.shape
    P = w1.shape[1]
    TM = _pick_row_tile(M, 4 * (Cin + P), vmem_budget)
    n_tiles = M // TM
    return pl.pallas_call(
        pre_kernel,
        grid=(n_tiles,),
        in_specs=[pl.BlockSpec((TM, Cin), lambda i: (i, 0)),
                  _const_spec((1, Cin)), _const_spec((1, Cin)),
                  _const_spec((Cin, P))],
        out_specs=(pl.BlockSpec((TM, P), lambda i: (i, 0)),
                   pl.BlockSpec((1, 2, P), lambda i: (i, 0, 0))),
        out_shape=(jax.ShapeDtypeStruct((M, P), jnp.float32),
                   jax.ShapeDtypeStruct((n_tiles, 2, P), jnp.float32)),
        compiler_params=pltpu.CompilerParams(
            dimension_semantics=("parallel",),
            vmem_limit_bytes=vmem_budget),
    )(x2, sc1, sh1, w1)


# ------ kernel 2: bn2 -> relu -> 3x3 stride-s conv (+ BN3 partials) --------- #

def make_conv2_kernel(stride, Hout, Wout, P):
    HWo = Hout * Wout

    def kernel(t_ref, sc2_ref, sh2_ref, w2_ref, u_ref, st_ref, pp_ref, col_ref):
        sc2 = sc2_ref[...]
        sh2 = sh2_ref[...]
        f32 = jnp.float32

        # bn2 -> relu into the zero-padded scratch.  Pad borders are re-zeroed
        # on EVERY step: the grid is "parallel", so scratch must not carry
        # state across steps/cores.
        if stride == 2:
            # t_ref: (2, 2, Hout, Wout, P) parity planes of this image's conv1
            # output (space-to-batch split done as layout glue).
            for ry in range(2):
                for rx in range(2):
                    pp_ref[ry, rx, 0:1, :, :] = jnp.zeros((1, Wout + 1, P), f32)
                    pp_ref[ry, rx, :, 0:1, :] = jnp.zeros((Hout + 1, 1, P), f32)
                    pp_ref[ry, rx, 1:, 1:, :] = jnp.maximum(
                        t_ref[ry, rx] * sc2 + sh2, 0.0)
        else:
            pp_ref[0:1, :, :] = jnp.zeros((1, Wout + 2, P), f32)
            pp_ref[Hout + 1:Hout + 2, :, :] = jnp.zeros((1, Wout + 2, P), f32)
            pp_ref[:, 0:1, :] = jnp.zeros((Hout + 2, 1, P), f32)
            pp_ref[:, Wout + 1:Wout + 2, :] = jnp.zeros((Hout + 2, 1, P), f32)
            pp_ref[1:Hout + 1, 1:Wout + 1, :] = jnp.maximum(
                t_ref[...] * sc2 + sh2, 0.0)

        # In-VMEM im2col: 9 shifted taps laid side by side on the lane dim,
        # then ONE MXU dot with a 9*P contraction (vs 9 narrow P-contractions).
        # TODO(synk): tap reads still start at sublane offset 0/1; an 8-aligned
        # scratch layout or pltpu.roll on the W axis would remove the masked
        # copies these offset slices imply.
        for ky in range(3):
            for kx in range(3):
                if stride == 2:
                    pr, r0 = (ky + 1) % 2, (ky + 1) // 2
                    pc, c0 = (kx + 1) % 2, (kx + 1) // 2
                    tap = pp_ref[pr, pc, r0:r0 + Hout, c0:c0 + Wout, :]
                else:
                    tap = pp_ref[ky:ky + Hout, kx:kx + Wout, :]
                k = ky * 3 + kx
                col_ref[:, k * P:(k + 1) * P] = tap.reshape(HWo, P)

        u = jnp.dot(col_ref[...].astype(MXU_DTYPE), w2_ref[...],
                    preferred_element_type=jnp.float32)
        u_ref[...] = u
        # Per-image BN3 partial sums (reduced in glue).
        st_ref[0, 0:1, :] = jnp.sum(u, axis=0, keepdims=True)
        st_ref[0, 1:2, :] = jnp.sum(u * u, axis=0, keepdims=True)

    return kernel


def _call_conv2(t_in, sc2, sh2, w2col, stride, Hout, Wout, P, N, vmem_budget):
    HWo = Hout * Wout
    Mo = N * HWo
    if stride == 2:
        t_spec = pl.BlockSpec((None, 2, 2, Hout, Wout, P),
                              lambda n: (n, 0, 0, 0, 0, 0))
        pad_scratch = pltpu.VMEM((2, 2, Hout + 1, Wout + 1, P), jnp.float32)
    else:
        t_spec = pl.BlockSpec((None, Hout, Wout, P), lambda n: (n, 0, 0, 0))
        pad_scratch = pltpu.VMEM((Hout + 2, Wout + 2, P), jnp.float32)
    return pl.pallas_call(
        make_conv2_kernel(stride, Hout, Wout, P),
        grid=(N,),                                    # one image per grid step
        in_specs=[t_spec, _const_spec((1, P)), _const_spec((1, P)),
                  _const_spec((9 * P, P))],
        out_specs=(pl.BlockSpec((HWo, P), lambda n: (n, 0)),
                   pl.BlockSpec((1, 2, P), lambda n: (n, 0, 0))),
        out_shape=(jax.ShapeDtypeStruct((Mo, P), jnp.float32),
                   jax.ShapeDtypeStruct((N, 2, P), jnp.float32)),
        scratch_shapes=[pad_scratch, pltpu.VMEM((HWo, 9 * P), jnp.float32)],
        compiler_params=pltpu.CompilerParams(
            dimension_semantics=("parallel",),
            vmem_limit_bytes=vmem_budget),
    )(t_in, sc2, sh2, w2col)


# ------ kernel 3: bn3 -> relu -> conv3 fused with the 1x1 shortcut ---------- #

def make_final_kernel(use_wsc):
    if use_wsc:
        def kernel(u_ref, x_ref, sc3_ref, sh3_ref, sc1_ref, sh1_ref,
                   w3_ref, wsc_ref, o_ref):
            h3 = jnp.maximum(u_ref[...] * sc3_ref[...] + sh3_ref[...], 0.0)
            a1 = jnp.maximum(x_ref[...] * sc1_ref[...] + sh1_ref[...], 0.0)
            # 0.5*conv3(h3) + 0.5*shortcut(a1): two MXU dots summed into one
            # f32 accumulator (no lane concat); 0.5 folded into the weights.
            o_ref[...] = (
                jnp.dot(h3.astype(MXU_DTYPE), w3_ref[...],
                        preferred_element_type=jnp.float32)
                + jnp.dot(a1.astype(MXU_DTYPE), wsc_ref[...],
                          preferred_element_type=jnp.float32))
    else:
        def kernel(u_ref, x_ref, sc3_ref, sh3_ref, sc1_ref, sh1_ref,
                   w3_ref, o_ref):
            # Identity shortcut (stride 1, Cin == C4): shortcut = relu(bn1(x)),
            # with the 0.5 folded into sc1/sh1 by the caller - direct add,
            # no eye-matmul.
            h3 = jnp.maximum(u_ref[...] * sc3_ref[...] + sh3_ref[...], 0.0)
            a1 = jnp.maximum(x_ref[...] * sc1_ref[...] + sh1_ref[...], 0.0)
            o_ref[...] = jnp.dot(h3.astype(MXU_DTYPE), w3_ref[...],
                                 preferred_element_type=jnp.float32) + a1
    return kernel


def _call_final(u2, xs2, sc3, sh3, sc1, sh1, w3, wsc, vmem_budget):
    Mo, P = u2.shape
    Cin = xs2.shape[1]
    C4 = w3.shape[1]
    TM = _pick_row_tile(Mo, 4 * (P + Cin + C4), vmem_budget)
    in_specs = [pl.BlockSpec((TM, P), lambda i: (i, 0)),
                pl.BlockSpec((TM, Cin), lambda i: (i, 0)),
                _const_spec((1, P)), _const_spec((1, P)),
                _const_spec((1, Cin)), _const_spec((1, Cin)),
                _const_spec((P, C4))]
    args = [u2, xs2, sc3, sh3, sc1, sh1, w3]
    if wsc is not None:
        in_specs.append(_const_spec((Cin, C4)))
        args.append(wsc)
    return pl.pallas_call(
        make_final_kernel(wsc is not None),
        grid=(Mo // TM,),
        in_specs=in_specs,
        out_specs=pl.BlockSpec((TM, C4), lambda i: (i, 0)),
        out_shape=jax.ShapeDtypeStruct((Mo, C4), jnp.float32),
        compiler_params=pltpu.CompilerParams(
            dimension_semantics=("parallel",),
            vmem_limit_bytes=vmem_budget),
    )(*args)


# ------------------------------ module forward ------------------------------ #

def preact_bottleneck(inputs, params, stride):
    x_nchw, cut = inputs
    N, Cin, H, W = x_nchw.shape
    P = params["w1"].shape[1]
    C4 = params["w3"].shape[1]
    s = stride
    assert s in (1, 2), "TODO(synk): only stride 1 and 2 are supported"
    if s == 2:
        assert H % 2 == 0 and W % 2 == 0, "TODO(synk): odd spatial dims, stride 2"
    Hout, Wout = H // s, W // s
    M, Mo = N * H * W, N * Hout * Wout

    budget = _vmem_budget_bytes()

    x = jnp.transpose(x_nchw, (0, 2, 3, 1)).astype(jnp.float32)   # NHWC (glue)
    x2 = x.reshape(M, Cin)

    # BN1 batch stats (training mode, biased var); gamma/beta folded into a
    # per-channel scale/shift so the kernels see a single FMA per element.
    mean1 = jnp.mean(x2, axis=0)
    var1 = jnp.mean(x2 * x2, axis=0) - mean1 * mean1
    sc1 = params["g1"] * lax.rsqrt(var1 + EPS)
    sh1 = params["b1"] - mean1 * sc1

    # Stage 1: relu(bn1(x)) @ w1 over VMEM-budgeted row tiles; BN2 partials.
    w1 = params["w1"].astype(MXU_DTYPE)
    t2, st2 = _call_pre(x2, sc1[None, :], sh1[None, :], w1, budget)
    tot2 = jnp.sum(st2, axis=0)
    mean2 = tot2[0] / M
    var2 = tot2[1] / M - mean2 * mean2
    sc2 = params["g2"] * lax.rsqrt(var2 + EPS)
    sh2 = params["b2"] - mean2 * sc2

    # Stage 2: bn2 -> relu -> 3x3/stride-s conv (in-kernel im2col, single dot).
    w2col = params["w2_hwio"].reshape(9 * P, P).astype(MXU_DTYPE)
    t4 = t2.reshape(N, H, W, P)
    if s == 2:
        # space-to-batch parity split (pure layout glue): strided conv taps
        # become static contiguous slices inside the kernel.
        t_in = t4.reshape(N, Hout, 2, Wout, 2, P).transpose(0, 2, 4, 1, 3, 5)
    else:
        t_in = t4
    u2, st3 = _call_conv2(t_in, sc2[None, :], sh2[None, :], w2col,
                          s, Hout, Wout, P, N, budget)
    tot3 = jnp.sum(st3, axis=0)
    mean3 = tot3[0] / Mo
    var3 = tot3[1] / Mo - mean3 * mean3
    sc3 = params["g3"] * lax.rsqrt(var3 + EPS)
    sh3 = params["b3"] - mean3 * sc3

    # Stage 3: bn3 -> relu -> conv3 + 1x1 shortcut (both only at output
    # resolution), 0.5 folded into the weights, two dots per tile.
    xs2 = x[:, ::s, ::s, :].reshape(Mo, Cin) if s == 2 else x2
    w3s = (0.5 * params["w3"]).astype(MXU_DTYPE)
    wsc = params.get("wsc")
    if wsc is not None:
        wscs = (0.5 * wsc).astype(MXU_DTYPE)
        out2 = _call_final(u2, xs2, sc3[None, :], sh3[None, :],
                           sc1[None, :], sh1[None, :], w3s, wscs, budget)
    else:
        assert s == 1 and Cin == C4, "identity shortcut requires stride 1, Cin==C4"
        out2 = _call_final(u2, xs2, sc3[None, :], sh3[None, :],
                           (0.5 * sc1)[None, :], (0.5 * sh1)[None, :],
                           w3s, None, budget)

    out = out2.reshape(N, Hout, Wout, C4).transpose(0, 3, 1, 2)   # back to NCHW
    return out, cut


# ---------------------------- pure-JAX reference ---------------------------- #

def _ref_forward(inputs, params, stride):
    x_nchw, cut = inputs
    x = jnp.transpose(x_nchw, (0, 2, 3, 1)).astype(jnp.float32)
    dn = ("NHWC", "HWIO", "NHWC")

    def bn(v, g, b):
        m = v.mean(axis=(0, 1, 2))
        var = ((v - m) ** 2).mean(axis=(0, 1, 2))
        return (v - m) * lax.rsqrt(var + EPS) * g + b

    Cin = x.shape[-1]
    P = params["w1"].shape[1]
    C4 = params["w3"].shape[1]

    a = jax.nn.relu(bn(x, params["g1"], params["b1"]))
    sc = lax.conv_general_dilated(a, params["wsc"].reshape(1, 1, Cin, C4),
                                  (stride, stride), "VALID",
                                  dimension_numbers=dn)
    t = lax.conv_general_dilated(a, params["w1"].reshape(1, 1, Cin, P),
                                 (1, 1), "VALID", dimension_numbers=dn)
    t = jax.nn.relu(bn(t, params["g2"], params["b2"]))
    t = lax.conv_general_dilated(t, params["w2_hwio"], (stride, stride),
                                 ((1, 1), (1, 1)), dimension_numbers=dn)
    t = jax.nn.relu(bn(t, params["g3"], params["b3"]))
    t = lax.conv_general_dilated(t, params["w3"].reshape(1, 1, P, C4),
                                 (1, 1), "VALID", dimension_numbers=dn)
    out = 0.5 * t + 0.5 * sc
    return out.transpose(0, 3, 1, 2), cut


# ----------------------------------- main ----------------------------------- #

if __name__ == "__main__":
    # PreActBottleneck(in_planes=4, planes=4, stride=2): expansion*planes = 16,
    # so the 1x1 stride-2 shortcut conv is present.
    N, Cin, H, W = 2, 4, 16, 16
    planes, stride = 4, 2
    C4 = 4 * planes

    key = jax.random.PRNGKey(0)
    ks = jax.random.split(key, 12)
    params = {
        "g1": 1.0 + 0.1 * jax.random.normal(ks[0], (Cin,), jnp.float32),
        "b1": 0.1 * jax.random.normal(ks[1], (Cin,), jnp.float32),
        "w1": 0.2 * jax.random.normal(ks[2], (Cin, planes), jnp.float32),
        "g2": 1.0 + 0.1 * jax.random.normal(ks[3], (planes,), jnp.float32),
        "b2": 0.1 * jax.random.normal(ks[4], (planes,), jnp.float32),
        "w2_hwio": 0.2 * jax.random.normal(ks[5], (3, 3, planes, planes), jnp.float32),
        "g3": 1.0 + 0.1 * jax.random.normal(ks[6], (planes,), jnp.float32),
        "b3": 0.1 * jax.random.normal(ks[7], (planes,), jnp.float32),
        "w3": 0.2 * jax.random.normal(ks[8], (planes, C4), jnp.float32),
        "wsc": 0.2 * jax.random.normal(ks[9], (Cin, C4), jnp.float32),
    }

    x = jax.random.normal(ks[10], (N, Cin, H, W), jnp.float32)
    cut = jax.random.normal(ks[11], (N, Cin, H, W), jnp.float32)

    out, cut_out = preact_bottleneck((x, cut), params, stride)
    out = jax.block_until_ready(out)

    ref_out, _ = _ref_forward((x, cut), params, stride)
    assert out.shape == (N, C4, H // stride, W // stride), out.shape
    tol = 5e-2 if MXU_DTYPE == jnp.bfloat16 else 1e-4
    err = float(jnp.max(jnp.abs(out - ref_out)))
    assert jnp.allclose(out, ref_out, atol=tol, rtol=tol), f"mismatch: {err}"
    assert jnp.array_equal(cut_out, cut)

    print("KERNEL_OK")
</pallas_src>

<mosaic_0001>
module attributes {stable_mosaic.version = 11 : i64} {
  func.func @pre_kernel(%arg0: i32, %arg1: memref<128x4xf32, #tpu.memory_space<vmem>>, %arg2: memref<1x4xf32, #tpu.memory_space<vmem>>, %arg3: memref<1x4xf32, #tpu.memory_space<vmem>>, %arg4: memref<4x4xbf16, #tpu.memory_space<vmem>>, %arg5: memref<128x4xf32, #tpu.memory_space<vmem>>, %arg6: memref<1x2x4xf32, #tpu.memory_space<vmem>>) attributes {dimension_semantics = [#tpu.dimension_semantics<parallel>], iteration_bounds = array<i64: 4>, scalar_prefetch = 0 : i64, scratch_operands = 0 : i64, tpu.core_type = #tpu.core_type<tc>, window_params = [{transform_indices = @transform_0, window_bounds = array<i64: 128, 4>}, {pipeline_mode = #tpu.pipeline_mode<synchronous>, transform_indices = @transform_1, window_bounds = array<i64: 1, 4>}, {pipeline_mode = #tpu.pipeline_mode<synchronous>, transform_indices = @transform_2, window_bounds = array<i64: 1, 4>}, {pipeline_mode = #tpu.pipeline_mode<synchronous>, transform_indices = @transform_3, window_bounds = array<i64: 4, 4>}, {transform_indices = @transform_4, window_bounds = array<i64: 128, 4>}, {transform_indices = @transform_5, window_bounds = array<i64: 1, 2, 4>}]} {
    %c0 = arith.constant 0 : index
    %c0_0 = arith.constant 0 : index
    %0 = vector.load %arg1[%c0, %c0_0] : memref<128x4xf32, #tpu.memory_space<vmem>>, vector<128x4xf32>
    %c0_1 = arith.constant 0 : index
    %c0_2 = arith.constant 0 : index
    %1 = vector.load %arg2[%c0_1, %c0_2] : memref<1x4xf32, #tpu.memory_space<vmem>>, vector<1x4xf32>
    %2 = vector.broadcast %1 : vector<1x4xf32> to vector<128x4xf32>
    %3 = arith.mulf %0, %2 : vector<128x4xf32>
    %c0_3 = arith.constant 0 : index
    %c0_4 = arith.constant 0 : index
    %4 = vector.load %arg3[%c0_3, %c0_4] : memref<1x4xf32, #tpu.memory_space<vmem>>, vector<1x4xf32>
    %5 = vector.broadcast %4 : vector<1x4xf32> to vector<128x4xf32>
    %6 = arith.addf %3, %5 : vector<128x4xf32>
    %cst = arith.constant 0.000000e+00 : f32
    %7 = vector.broadcast %cst : f32 to vector<128x4xf32>
    %8 = arith.maximumf %6, %7 : vector<128x4xf32>
    %9 = arith.truncf %8 : vector<128x4xf32> to vector<128x4xbf16>
    %c0_5 = arith.constant 0 : index
    %c0_6 = arith.constant 0 : index
    %10 = vector.load %arg4[%c0_5, %c0_6] : memref<4x4xbf16, #tpu.memory_space<vmem>>, vector<4x4xbf16>
    %cst_7 = arith.constant dense<0.000000e+00> : vector<128x4xf32>
    %11 = tpu.matmul %9, %10, %cst_7 {dimension_numbers = #tpu.dot_dimension_numbers<[1], [0], [0], [1], [0, 0, 1, 1], [], []>} : vector<128x4xbf16>, vector<4x4xbf16>, vector<128x4xf32> -> vector<128x4xf32>
    %c0_8 = arith.constant 0 : index
    %c0_9 = arith.constant 0 : index
    %12 = vector.load %arg5[%c0_8, %c0_9] : memref<128x4xf32, #tpu.memory_space<vmem>>, vector<128x4xf32>
    tpu.vector_store %arg5[%c0_8, %c0_9], %11 {strides = array<i32>} : memref<128x4xf32, #tpu.memory_space<vmem>>, vector<128x4xf32>,
    %cst_10 = arith.constant dense<0.000000e+00> : vector<4xf32>
    %13 = vector.multi_reduction <add>, %11, %cst_10 [0] : vector<128x4xf32> to vector<4xf32>
    %14 = vector.shape_cast %13 : vector<4xf32> to vector<1x4xf32>
    %c0_11 = arith.constant 0 : index
    %c0_12 = arith.constant 0 : index
    %c0_13 = arith.constant 0 : index
    %15 = vector.load %arg6[%c0_11, %c0_12, %c0_13] : memref<1x2x4xf32, #tpu.memory_space<vmem>>, vector<1x1x4xf32>
    %16 = vector.shape_cast %15 : vector<1x1x4xf32> to vector<1x4xf32>
    %17 = vector.shape_cast %14 : vector<1x4xf32> to vector<1x1x4xf32>
    tpu.vector_store %arg6[%c0_11, %c0_12, %c0_13], %17 {strides = array<i32>} : memref<1x2x4xf32, #tpu.memory_space<vmem>>, vector<1x1x4xf32>,
    %18 = arith.mulf %11, %11 : vector<128x4xf32>
    %cst_14 = arith.constant dense<0.000000e+00> : vector<4xf32>
    %19 = vector.multi_reduction <add>, %18, %cst_14 [0] : vector<128x4xf32> to vector<4xf32>
    %20 = vector.shape_cast %19 : vector<4xf32> to vector<1x4xf32>
    %c0_15 = arith.constant 0 : index
    %c1 = arith.constant 1 : index
    %c0_16 = arith.constant 0 : index
    %21 = vector.load %arg6[%c0_15, %c1, %c0_16] : memref<1x2x4xf32, #tpu.memory_space<vmem>>, vector<1x1x4xf32>
    %22 = vector.shape_cast %21 : vector<1x1x4xf32> to vector<1x4xf32>
    %23 = vector.shape_cast %20 : vector<1x4xf32> to vector<1x1x4xf32>
    tpu.vector_store %arg6[%c0_15, %c1, %c0_16], %23 {strides = array<i32>} : memref<1x2x4xf32, #tpu.memory_space<vmem>>, vector<1x1x4xf32>,
    return
  }
  func.func @transform_0(%arg0: i32) -> (i32, i32) {
    %c0_i32 = arith.constant 0 : i32
    %c0_i32_0 = arith.constant 0 : i32
    return %arg0, %c0_i32 : i32, i32
  }
  func.func @transform_1(%arg0: i32) -> (i32, i32) {
    %c0_i32 = arith.constant 0 : i32
    %c0_i32_0 = arith.constant 0 : i32
    %c0_i32_1 = arith.constant 0 : i32
    return %c0_i32, %c0_i32_0 : i32, i32
  }
  func.func @transform_2(%arg0: i32) -> (i32, i32) {
    %c0_i32 = arith.constant 0 : i32
    %c0_i32_0 = arith.constant 0 : i32
    %c0_i32_1 = arith.constant 0 : i32
    return %c0_i32, %c0_i32_0 : i32, i32
  }
  func.func @transform_3(%arg0: i32) -> (i32, i32) {
    %c0_i32 = arith.constant 0 : i32
    %c0_i32_0 = arith.constant 0 : i32
    %c0_i32_1 = arith.constant 0 : i32
    return %c0_i32, %c0_i32_0 : i32, i32
  }
  func.func @transform_4(%arg0: i32) -> (i32, i32) {
    %c0_i32 = arith.constant 0 : i32
    %c0_i32_0 = arith.constant 0 : i32
    return %arg0, %c0_i32 : i32, i32
  }
  func.func @transform_5(%arg0: i32) -> (i32, i32, i32) {
    %c0_i32 = arith.constant 0 : i32
    %c0_i32_0 = arith.constant 0 : i32
    %c0_i32_1 = arith.constant 0 : i32
    return %arg0, %c0_i32, %c0_i32_0 : i32, i32, i32
  }
}

</mosaic_0001>

<llo_original>
// kernel: tpu_custom_call.1
$region0: #{tpu_custom_call.1}
  #allocation0 [shape = 'u32[]', space=smem, size = 0x4, offset = 0x4, fixed_abs, tag = 'smem constant byte address 0x4 - core index']
  #allocation1 [shape = 'u32[144,128]{1,0:T(1,128)}', space=vmem, size = 0x12000, scoped, tag = 'internal scratch']
  %s0 = inlined_call_operand.vmem [shape: f32[512,4], index: 0, kind: input, shape index: {}]
  %s1 = inlined_call_operand.vmem [shape: f32[1,4], index: 1, kind: input, shape index: {}]
  %s2 = inlined_call_operand.vmem [shape: f32[1,4], index: 2, kind: input, shape index: {}]
  %s3 = inlined_call_operand.vmem [shape: bf16[4,4], index: 3, kind: input, shape index: {}]
  %s4 = inlined_call_operand.vmem [shape: f32[512,4], index: 4, kind: output, shape index: {0}]
  %s5 = inlined_call_operand.hbm [shape: f32[4,2,4], index: 5, kind: output, shape index: {1}]
  %6 = xla_tuple %s4, %s5
  %s7 = sld [smem:[#allocation0]]
  $region57: #{tpu_custom_call.1} parent=0
    _
  %s9 = ssub.s32 1, %s7
  %s10 = scalar_select 0, %s9, %s7
  $region1: #{tpu_custom_call.1} parent=0
    #allocation2 [shape = 'u8[2048]{0}', space=vmem, size = 0x800, scoped, tag = 'output window, operand 1']
    #allocation3 [shape = 's32[2]{0}', space=sflag, size = 0x8, scoped, tag = 'scoped memory for tpu_custom_call.1']
    %11 = vsyncpa [#allocation3], 0
    %s12 = scalar_lea.sflag [#allocation3], 1
    %13 = vsyncpa %s12, 0
    loop: start=0, step=1, limit=6
    $region2: #{tpu_custom_call.1} parent=1 // loop_pre_header
      _
    $region3: #{tpu_custom_call.1} parent=1 // loop_header
      %s15 = sphi 0, %s19
      %p16 = scmp.ge.s32.totalorder %s15, 6
      %s25 = sphi 0, %s27
      %s28 = sphi 0, %s25
      %s29 = sphi 0, %s28
      %s45 = sphi 0, %s29
      %s49 = sphi 0, %s49
      %s51 = sphi 0, %s49
      %s52 = sphi 0, %s51
      %s66 = sphi 0, %s52
      %s70 = sphi 0, %s70
      %s72 = sphi 0, %s70
      %s73 = sphi 0, %s72
      %s87 = sphi 0, %s73
      %s91 = sphi 0, %s91
      %s93 = sphi 0, %s91
      %s94 = sphi 0, %s93
      %s108 = sphi 0, %s94
      %s114 = sphi 0, %s116
      %s117 = sphi 0, %s114
      %s118 = sphi 0, %s117
      %s134 = sphi 0, %s118
      %s140 = sphi 0, %s142
      %s143 = sphi 0, %s140
      %s144 = sphi 0, %s143
      %s160 = sphi 0, %s144
    $region4: #{tpu_custom_call.1} parent=1 // loop_header_branch
      %18 = sbr.rel (%p16) target = $region8
    $region5: #{tpu_custom_call.1} parent=1 // loop_body
      %s20 = ssub.s32 %s15, 1
      %s21 = ssub.s32 %s15, 2
      %s22 = sadd.s32 %s15, 1
      %s23 = ssub.s32 %s15, %s22
      %p24 = scmp.eq.s32.totalorder %s23, 0
      %s26 = sadd.s32 %s25, 1
      %s27 = scalar_select %p24, %s25, %s26
      %p30 = pneg %p24
      %p31 = scmp.eq.s32.totalorder %s15, 3
      %p32 = por %p30, %p31
      %p33 = scmp.ne.s32.totalorder %s25, %s28
      %p34 = scmp.eq.s32.totalorder %s15, 0
      %p35 = por %p33, %p34
      %p36 = scmp.ne.s32.totalorder %s25, %s28
      %p37 = scmp.eq.s32.totalorder %s20, 3
      %p38 = por %p36, %p37
      %p39 = scmp.ne.s32.totalorder %s28, %s29
      %p40 = scmp.eq.s32.totalorder %s20, 0
      %p41 = por %p39, %p40
      %p42 = scmp.ne.s32.totalorder %s28, %s29
      %p43 = scmp.eq.s32.totalorder %s21, 3
      %p44 = por %p42, %p43
      %p46 = scmp.ne.s32.totalorder %s29, %s45
      %p47 = scmp.eq.s32.totalorder %s21, 0
      %p48 = por %p46, %p47
      %s50 = sadd.s32 %s49, 1
      %p53 = scmp.eq.s32.totalorder %s15, 3
      %p54 = scmp.ne.s32.totalorder %s49, %s51
      %p55 = scmp.eq.s32.totalorder %s15, 0
      %p56 = por %p54, %p55
      %p57 = scmp.ne.s32.totalorder %s49, %s51
      %p58 = scmp.eq.s32.totalorder %s20, 3
      %p59 = por %p57, %p58
      %p60 = scmp.ne.s32.totalorder %s51, %s52
      %p61 = scmp.eq.s32.totalorder %s20, 0
      %p62 = por %p60, %p61
      %p63 = scmp.ne.s32.totalorder %s51, %s52
      %p64 = scmp.eq.s32.totalorder %s21, 3
      %p65 = por %p63, %p64
      %p67 = scmp.ne.s32.totalorder %s52, %s66
      %p68 = scmp.eq.s32.totalorder %s21, 0
      %p69 = por %p67, %p68
      %s71 = sadd.s32 %s70, 1
      %p74 = scmp.eq.s32.totalorder %s15, 3
      %p75 = scmp.ne.s32.totalorder %s70, %s72
      %p76 = scmp.eq.s32.totalorder %s15, 0
      %p77 = por %p75, %p76
      %p78 = scmp.ne.s32.totalorder %s70, %s72
      %p79 = scmp.eq.s32.totalorder %s20, 3
      %p80 = por %p78, %p79
      %p81 = scmp.ne.s32.totalorder %s72, %s73
      %p82 = scmp.eq.s32.totalorder %s20, 0
      %p83 = por %p81, %p82
      %p84 = scmp.ne.s32.totalorder %s72, %s73
      %p85 = scmp.eq.s32.totalorder %s21, 3
      %p86 = por %p84, %p85
      %p88 = scmp.ne.s32.totalorder %s73, %s87
      %p89 = scmp.eq.s32.totalorder %s21, 0
      %p90 = por %p88, %p89
      %s92 = sadd.s32 %s91, 1
      %p95 = scmp.eq.s32.totalorder %s15, 3
      %p96 = scmp.ne.s32.totalorder %s91, %s93
      %p97 = scmp.eq.s32.totalorder %s15, 0
      %p98 = por %p96, %p97
      %p99 = scmp.ne.s32.totalorder %s91, %s93
      %p100 = scmp.eq.s32.totalorder %s20, 3
      %p101 = por %p99, %p100
      %p102 = scmp.ne.s32.totalorder %s93, %s94
      %p103 = scmp.eq.s32.totalorder %s20, 0
      %p104 = por %p102, %p103
      %p105 = scmp.ne.s32.totalorder %s93, %s94
      %p106 = scmp.eq.s32.totalorder %s21, 3
      %p107 = por %p105, %p106
      %p109 = scmp.ne.s32.totalorder %s94, %s108
      %p110 = scmp.eq.s32.totalorder %s21, 0
      %p111 = por %p109, %p110
      %s112 = ssub.s32 %s15, %s22
      %p113 = scmp.eq.s32.totalorder %s112, 0
      %s115 = sadd.s32 %s114, 1
      %s116 = scalar_select %p113, %s114, %s115
      %p119 = pneg %p113
      %p120 = scmp.eq.s32.totalorder %s15, 3
      %p121 = por %p119, %p120
      %p122 = scmp.ne.s32.totalorder %s114, %s117
      %p123 = scmp.eq.s32.totalorder %s15, 0
      %p124 = por %p122, %p123
      %p125 = scmp.ne.s32.totalorder %s114, %s117
      %p126 = scmp.eq.s32.totalorder %s20, 3
      %p127 = por %p125, %p126
      %p128 = scmp.ne.s32.totalorder %s117, %s118
      %p129 = scmp.eq.s32.totalorder %s20, 0
      %p130 = por %p128, %p129
      %p131 = scmp.ne.s32.totalorder %s117, %s118
      %p132 = scmp.eq.s32.totalorder %s21, 3
      %p133 = por %p131, %p132
      %p135 = scmp.ne.s32.totalorder %s118, %s134
      %p136 = scmp.eq.s32.totalorder %s21, 0
      %p137 = por %p135, %p136
      %s138 = ssub.s32 %s15, %s22
      %p139 = scmp.eq.s32.totalorder %s138, 0
      %s141 = sadd.s32 %s140, 1
      %s142 = scalar_select %p139, %s140, %s141
      %p145 = pneg %p139
      %p146 = scmp.eq.s32.totalorder %s15, 3
      %p147 = por %p145, %p146
      %p148 = scmp.ne.s32.totalorder %s140, %s143
      %p149 = scmp.eq.s32.totalorder %s15, 0
      %p150 = por %p148, %p149
      %p151 = scmp.ne.s32.totalorder %s140, %s143
      %p152 = scmp.eq.s32.totalorder %s20, 3
      %p153 = por %p151, %p152
      %p154 = scmp.ne.s32.totalorder %s143, %s144
      %p155 = scmp.eq.s32.totalorder %s20, 0
      %p156 = por %p154, %p155
      %p157 = scmp.ne.s32.totalorder %s143, %s144
      %p158 = scmp.eq.s32.totalorder %s21, 3
      %p159 = por %p157, %p158
      %p161 = scmp.ne.s32.totalorder %s144, %s160
      %p162 = scmp.eq.s32.totalorder %s21, 0
      %p163 = por %p161, %p162
      %p164 = scmp.le.s32.totalorder 1, %s15
      %p165 = scmp.lt.s32.totalorder %s15, 5
      %p166 = pnand %p164, %p165
      %p167 = pneg %p166
      // Predicated region
      $region9: #{tpu_custom_call.1} parent=5 // pred_check
        _
      $region10: #{tpu_custom_call.1} parent=5 // pred_check_branch
        %169 = sbr.rel (%p166) target = $region12
      $region11: #{tpu_custom_call.1} parent=5 // pred_region
        %s170 = ssub.s32 %s15, 1
        // Predicated region
        $region13: #{tpu_custom_call.1} parent=11 // pred_check
          %p171 = pneg %p62
        $region14: #{tpu_custom_call.1} parent=11 // pred_check_branch
          %173 = sbr.rel (%p171) target = $region16
        $region15: #{tpu_custom_call.1} parent=11 // pred_region
          _
        $region16: #{tpu_custom_call.1} parent=11 // pred_fallthru
          _
        // Predicated region
        $region17: #{tpu_custom_call.1} parent=11 // pred_check
          %p174 = pneg %p83
        $region18: #{tpu_custom_call.1} parent=11 // pred_check_branch
          %176 = sbr.rel (%p174) target = $region20
        $region19: #{tpu_custom_call.1} parent=11 // pred_region
          _
        $region20: #{tpu_custom_call.1} parent=11 // pred_fallthru
          _
        // Predicated region
        $region21: #{tpu_custom_call.1} parent=11 // pred_check
          %p177 = pneg %p104
        $region22: #{tpu_custom_call.1} parent=11 // pred_check_branch
          %179 = sbr.rel (%p177) target = $region24
        $region23: #{tpu_custom_call.1} parent=11 // pred_region
          _
        $region24: #{tpu_custom_call.1} parent=11 // pred_fallthru
          _
      $region12: #{tpu_custom_call.1} parent=5 // pred_fallthru
        _
      %p180 = scmp.lt.s32.totalorder %s15, 4
      // Predicated region
      $region25: #{tpu_custom_call.1} parent=5 // pred_check
        %p181 = pneg %p180
      $region26: #{tpu_custom_call.1} parent=5 // pred_check_branch
        %183 = sbr.rel (%p181) target = $region28
      $region27: #{tpu_custom_call.1} parent=5 // pred_region
        // Predicated region
        $region29: #{tpu_custom_call.1} parent=27 // pred_check
          %p184 = pneg %p35
        $region30: #{tpu_custom_call.1} parent=27 // pred_check_branch
          %186 = sbr.rel (%p184) target = $region32
        $region31: #{tpu_custom_call.1} parent=27 // pred_region
          %s187 = smul.u32 16, %s15
          %p188 = scmp.lt.s32.totalorder %s187, 63
          %s189 = scalar_select %p188, %s187, 63
          %s190 = smul.addr %s189, 8
          %s191 = scalar_lea.vmem %s0, %s190
          %s192 = smul.u32 16, %s15
        $region32: #{tpu_custom_call.1} parent=27 // pred_fallthru
          _
      $region28: #{tpu_custom_call.1} parent=5 // pred_fallthru
        _
      %p193 = scmp.le.s32.totalorder 1, %s15
      %p194 = scmp.lt.s32.totalorder %s15, 5
      %p195 = pnand %p193, %p194
      %p196 = pneg %p195
      // Predicated region
      $region33: #{tpu_custom_call.1} parent=5 // pred_check
        _
      $region34: #{tpu_custom_call.1} parent=5 // pred_check_branch
        %198 = sbr.rel (%p195) target = $region36
      $region35: #{tpu_custom_call.1} parent=5 // pred_region
        %s199 = ssub.s32 %s15, 1
        %s200 = smul.u32 16, %s20
        %p201 = scmp.lt.s32.totalorder %s200, 63
        %s202 = scalar_select %p201, %s200, 63
        %s203 = smul.addr %s202, 8
        %s204 = scalar_lea.vmem %s0, %s203
        %p205 = pneg %p41
        %p206 = pneg %p38
        %p207 = pneg %p62
        %p208 = pneg %p59
        %p209 = pneg %p83
        %p210 = pneg %p80
        %p211 = pneg %p104
        %p212 = pneg %p101
        %p213 = pneg %p130
        %p214 = pneg %p127
        %s215 = smul.u32 16, %s20
        %p216 = scmp.lt.s32.totalorder %s215, 63
        %s217 = scalar_select %p216, %s215, 63
        %s218 = smul.addr %s217, 8
        %s219 = scalar_lea.vmem %s4, %s218
        %p220 = pneg %p156
        %p221 = pneg %p153
        %s222 = sand.u32 %s143, 1
        %s223 = scalar_lea.sflag [#allocation3], %s222
        %s224 = sand.u32 %s143, 1
        %s225 = smul.addr %s224, 2
        %s226 = scalar_lea.vmem [#allocation2], %s225
        %s227 = smul.u32 16, %s20
        %p228 = scmp.lt.s32.totalorder %s227, 63
        %s229 = scalar_select %p228, %s227, 63
        %s230 = smul.addr %s229, 8
        %s231 = scalar_lea.vmem %s0, %s230
        %s232 = smul.u32 16, %s20
        %s233 = smul.u32 16, %s20
        %p234 = scmp.lt.s32.totalorder %s233, 63
        %s235 = scalar_select %p234, %s233, 63
        %s236 = smul.addr %s235, 8
        %s237 = scalar_lea.vmem %s4, %s236
        %s238 = smul.u32 16, %s20
        %v240 = vld [vmem:[%s231] sm:$0xff]
        %v241 = vld [vmem:[%s231 + $0x8] sm:$0xff]
        %v242 = vld [vmem:[%s231 + $0x10] sm:$0xff]
        %v243 = vld [vmem:[%s231 + $0x18] sm:$0xff]
        %v244 = vld [vmem:[%s231 + $0x20] sm:$0xff]
        %v245 = vld [vmem:[%s231 + $0x28] sm:$0xff]
        %v246 = vld [vmem:[%s231 + $0x30] sm:$0xff]
        %v247 = vld [vmem:[%s231 + $0x38] sm:$0xff]
        %v248 = vld [vmem:[%s231 + $0x40] sm:$0xff]
        %v249 = vld [vmem:[%s231 + $0x48] sm:$0xff]
        %v250 = vld [vmem:[%s231 + $0x50] sm:$0xff]
        %v251 = vld [vmem:[%s231 + $0x58] sm:$0xff]
        %v252 = vld [vmem:[%s231 + $0x60] sm:$0xff]
        %v253 = vld [vmem:[%s231 + $0x68] sm:$0xff]
        %v254 = vld [vmem:[%s231 + $0x70] sm:$0xff]
        %v255 = vld [vmem:[%s231 + $0x78] sm:$0xff]
        %v256 = vld [vmem:[%s1] sm:$0x1]
        %v258 = vlaneseq
        %v259 = vshrl.u32 %v258, 7
        %v260 = vsub.s32 0, %v259
        %v261 = vrot.slane %v256, %v260
        %v263 = vmul.f32 %v240, %v261
        %v264 = vmul.f32 %v241, %v261
        %v265 = vmul.f32 %v242, %v261
        %v266 = vmul.f32 %v243, %v261
        %v267 = vmul.f32 %v244, %v261
        %v268 = vmul.f32 %v245, %v261
        %v269 = vmul.f32 %v246, %v261
        %v270 = vmul.f32 %v247, %v261
        %v271 = vmul.f32 %v248, %v261
        %v272 = vmul.f32 %v249, %v261
        %v273 = vmul.f32 %v250, %v261
        %v274 = vmul.f32 %v251, %v261
        %v275 = vmul.f32 %v252, %v261
        %v276 = vmul.f32 %v253, %v261
        %v277 = vmul.f32 %v254, %v261
        %v278 = vmul.f32 %v255, %v261
        %v279 = vld [vmem:[%s2] sm:$0x1]
        %v281 = vlaneseq
        %v282 = vshrl.u32 %v281, 7
        %v283 = vsub.s32 0, %v282
        %v284 = vrot.slane %v279, %v283
        %v286 = vadd.f32 %v263, %v284
        %v287 = vadd.f32 %v264, %v284
        %v288 = vadd.f32 %v265, %v284
        %v289 = vadd.f32 %v266, %v284
        %v290 = vadd.f32 %v267, %v284
        %v291 = vadd.f32 %v268, %v284
        %v292 = vadd.f32 %v269, %v284
        %v293 = vadd.f32 %v270, %v284
        %v294 = vadd.f32 %v271, %v284
        %v295 = vadd.f32 %v272, %v284
        %v296 = vadd.f32 %v273, %v284
        %v297 = vadd.f32 %v274, %v284
        %v298 = vadd.f32 %v275, %v284
        %v299 = vadd.f32 %v276, %v284
        %v300 = vadd.f32 %v277, %v284
        %v301 = vadd.f32 %v278, %v284
        %v302 = vmax.f32 %v286, 0.0
        %v303 = vmax.f32 %v287, 0.0
        %v304 = vmax.f32 %v288, 0.0
        %v305 = vmax.f32 %v289, 0.0
        %v306 = vmax.f32 %v290, 0.0
        %v307 = vmax.f32 %v291, 0.0
        %v308 = vmax.f32 %v292, 0.0
        %v309 = vmax.f32 %v293, 0.0
        %v310 = vmax.f32 %v294, 0.0
        %v311 = vmax.f32 %v295, 0.0
        %v312 = vmax.f32 %v296, 0.0
        %v313 = vmax.f32 %v297, 0.0
        %v314 = vmax.f32 %v298, 0.0
        %v315 = vmax.f32 %v299, 0.0
        %v316 = vmax.f32 %v300, 0.0
        %v317 = vmax.f32 %v301, 0.0
        %v318 = vpack.c.bf16 %v303, %v302
        %v319 = vpack.c.bf16 %v305, %v304
        %v320 = vpack.c.bf16 %v307, %v306
        %v321 = vpack.c.bf16 %v309, %v308
        %v322 = vpack.c.bf16 %v311, %v310
        %v323 = vpack.c.bf16 %v313, %v312
        %v324 = vpack.c.bf16 %v315, %v314
        %v325 = vpack.c.bf16 %v317, %v316
        %v326 = vld [vmem:[%s3] sm:$0x3]
        %vm327 = vcmask 31744
        %v329 = vsel %vm327, %v318, 0
        %v332 = vsel %vm327, %v319, 0
        %v335 = vsel %vm327, %v320, 0
        %v338 = vsel %vm327, %v321, 0
        %v341 = vsel %vm327, %v322, 0
        %v344 = vsel %vm327, %v323, 0
        %v347 = vsel %vm327, %v324, 0
        %v350 = vsel %vm327, %v325, 0
        %vm352 = vcmask 1041408
        %v354 = vsel %vm352, %v326, 0
        %356 = vmatprep.subr.bf16.mxu0 0
        %357 = vmatpush1.bf16.msra.mxu0 0
        %358 = vmatprep.subr.bf16.mxu0 0
        %359 = vmatpush1.bf16.msra.mxu0 0
        %360 = vmatprep.subr.bf16.mxu0 0
        %361 = vmatpush1.bf16.msra.mxu0 0
        %362 = vmatprep.subr.bf16.mxu0 0
        %363 = vmatpush1.bf16.msra.mxu0 0
        %364 = vmatprep.subr.bf16.mxu0 0
        %365 = vmatpush1.bf16.msra.mxu0 0
        %366 = vmatprep.subr.bf16.mxu0 0
        %367 = vmatpush1.bf16.msra.mxu0 0
        %368 = vmatprep.subr.bf16.mxu0 0
        %369 = vmatpush1.bf16.msra.mxu0 0
        %370 = vmatprep.subr.bf16.mxu0 0
        %371 = vmatpush1.bf16.msra.mxu0 %v354
        %372 = vmatprep.subr.bf16.mxu0 0
        %373 = vmatpush2.bf16.msra.mxu0 0
        %374 = vmatprep.subr.bf16.mxu0 0
        %375 = vmatpush2.bf16.msra.mxu0 0
        %376 = vmatprep.subr.bf16.mxu0 0
        %377 = vmatpush2.bf16.msra.mxu0 0
        %378 = vmatprep.subr.bf16.mxu0 0
        %379 = vmatpush2.bf16.msra.mxu0 0
        %380 = vmatprep.subr.bf16.mxu0 0
        %381 = vmatpush2.bf16.msra.mxu0 0
        %382 = vmatprep.subr.bf16.mxu0 0
        %383 = vmatpush2.bf16.msra.mxu0 0
        %384 = vmatprep.subr.bf16.mxu0 0
        %385 = vmatpush2.bf16.msra.mxu0 0
        %386 = vmatprep.subr.bf16.mxu0 0
        %387 = vmatpush2.bf16.msra.mxu0 0
        %388 = vmatprep.mubr.bf16.mxu0 0
        %389 = vmatmul.mubr.bf16.gmra.mxu0 %v329
        %v390 = vpop.f32.mrf.mxu0
        %v391 = vadd.f32 0.0, %v390
        %v392 = vpop.f32.mrf.mxu0
        %v393 = vpop.f32.mrf.mxu0
        %v394 = vadd.f32 0.0, %v393
        %v395 = vpop.f32.mrf.mxu0
        %396 = vmatprep.mubr.bf16.mxu0 0
        %397 = vmatmul.mubr.bf16.gmra.mxu0 %v332
        %v398 = vpop.f32.mrf.mxu0
        %v399 = vadd.f32 0.0, %v398
        %v400 = vpop.f32.mrf.mxu0
        %v401 = vpop.f32.mrf.mxu0
        %v402 = vadd.f32 0.0, %v401
        %v403 = vpop.f32.mrf.mxu0
        %404 = vmatprep.mubr.bf16.mxu0 0
        %405 = vmatmul.mubr.bf16.gmra.mxu0 %v335
        %v406 = vpop.f32.mrf.mxu0
        %v407 = vadd.f32 0.0, %v406
        %v408 = vpop.f32.mrf.mxu0
        %v409 = vpop.f32.mrf.mxu0
        %v410 = vadd.f32 0.0, %v409
        %v411 = vpop.f32.mrf.mxu0
        %412 = vmatprep.mubr.bf16.mxu0 0
        %413 = vmatmul.mubr.bf16.gmra.mxu0 %v338
        %v414 = vpop.f32.mrf.mxu0
        %v415 = vadd.f32 0.0, %v414
        %v416 = vpop.f32.mrf.mxu0
        %v417 = vpop.f32.mrf.mxu0
        %v418 = vadd.f32 0.0, %v417
        %v419 = vpop.f32.mrf.mxu0
        %420 = vmatprep.mubr.bf16.mxu0 0
        %421 = vmatmul.mubr.bf16.gmra.mxu0 %v341
        %v422 = vpop.f32.mrf.mxu0
        %v423 = vadd.f32 0.0, %v422
        %v424 = vpop.f32.mrf.mxu0
        %v425 = vpop.f32.mrf.mxu0
        %v426 = vadd.f32 0.0, %v425
        %v427 = vpop.f32.mrf.mxu0
        %428 = vmatprep.mubr.bf16.mxu0 0
        %429 = vmatmul.mubr.bf16.gmra.mxu0 %v344
        %v430 = vpop.f32.mrf.mxu0
        %v431 = vadd.f32 0.0, %v430
        %v432 = vpop.f32.mrf.mxu0
        %v433 = vpop.f32.mrf.mxu0
        %v434 = vadd.f32 0.0, %v433
        %v435 = vpop.f32.mrf.mxu0
        %436 = vmatprep.mubr.bf16.mxu0 0
        %437 = vmatmul.mubr.bf16.gmra.mxu0 %v347
        %v438 = vpop.f32.mrf.mxu0
        %v439 = vadd.f32 0.0, %v438
        %v440 = vpop.f32.mrf.mxu0
        %v441 = vpop.f32.mrf.mxu0
        %v442 = vadd.f32 0.0, %v441
        %v443 = vpop.f32.mrf.mxu0
        %444 = vmatprep.mubr.bf16.mxu0 0
        %445 = vmatmul.mubr.bf16.gmra.mxu0 %v350
        %v446 = vpop.f32.mrf.mxu0
        %v447 = vadd.f32 0.0, %v446
        %v448 = vpop.f32.mrf.mxu0
        %v449 = vpop.f32.mrf.mxu0
        %v450 = vadd.f32 0.0, %v449
        %v451 = vpop.f32.mrf.mxu0
        %452 = vdwg.mxu0
        %453 = vst.msk [vmem:[%s237] sm:$0xff] %vm327, %v391
        %454 = vst.msk [vmem:[%s237 + $0x8] sm:$0xff] %vm327, %v394
        %455 = vst.msk [vmem:[%s237 + $0x10] sm:$0xff] %vm327, %v399
        %456 = vst.msk [vmem:[%s237 + $0x18] sm:$0xff] %vm327, %v402
        %457 = vst.msk [vmem:[%s237 + $0x20] sm:$0xff] %vm327, %v407
        %458 = vst.msk [vmem:[%s237 + $0x28] sm:$0xff] %vm327, %v410
        %459 = vst.msk [vmem:[%s237 + $0x30] sm:$0xff] %vm327, %v415
        %460 = vst.msk [vmem:[%s237 + $0x38] sm:$0xff] %vm327, %v418
        %461 = vst.msk [vmem:[%s237 + $0x40] sm:$0xff] %vm327, %v423
        %462 = vst.msk [vmem:[%s237 + $0x48] sm:$0xff] %vm327, %v426
        %463 = vst.msk [vmem:[%s237 + $0x50] sm:$0xff] %vm327, %v431
        %464 = vst.msk [vmem:[%s237 + $0x58] sm:$0xff] %vm327, %v434
        %465 = vst.msk [vmem:[%s237 + $0x60] sm:$0xff] %vm327, %v439
        %466 = vst.msk [vmem:[%s237 + $0x68] sm:$0xff] %vm327, %v442
        %467 = vst.msk [vmem:[%s237 + $0x70] sm:$0xff] %vm327, %v447
        %468 = vst.msk [vmem:[%s237 + $0x78] sm:$0xff] %vm327, %v450
        %v469 = vsel %vm327, %v391, 0.0
        %v470 = vsel %vm327, %v394, 0.0
        %v471 = vadd.f32 %v469, %v470
        %v472 = vsel %vm327, %v399, 0.0
        %v473 = vadd.f32 %v471, %v472
        %v474 = vsel %vm327, %v402, 0.0
        %v475 = vadd.f32 %v473, %v474
        %v476 = vsel %vm327, %v407, 0.0
        %v477 = vadd.f32 %v475, %v476
        %v478 = vsel %vm327, %v410, 0.0
        %v479 = vadd.f32 %v477, %v478
        %v480 = vsel %vm327, %v415, 0.0
        %v481 = vadd.f32 %v479, %v480
        %v482 = vsel %vm327, %v418, 0.0
        %v483 = vadd.f32 %v481, %v482
        %v484 = vsel %vm327, %v423, 0.0
        %v485 = vadd.f32 %v483, %v484
        %v486 = vsel %vm327, %v426, 0.0
        %v487 = vadd.f32 %v485, %v486
        %v488 = vsel %vm327, %v431, 0.0
        %v489 = vadd.f32 %v487, %v488
        %v490 = vsel %vm327, %v434, 0.0
        %v491 = vadd.f32 %v489, %v490
        %v492 = vsel %vm327, %v439, 0.0
        %v493 = vadd.f32 %v491, %v492
        %v494 = vsel %vm327, %v442, 0.0
        %v495 = vadd.f32 %v493, %v494
        %v496 = vsel %vm327, %v447, 0.0
        %v497 = vadd.f32 %v495, %v496
        %v498 = vsel %vm327, %v450, 0.0
        %v499 = vadd.f32 %v497, %v498
        %v500 = vrot.slane %v499, 4
        %v501 = vadd.f32 %v499, %v500
        %v502 = vrot.slane %v501, 2
        %v503 = vadd.f32 %v501, %v502
        %v504 = vrot.slane %v503, 1
        %v505 = vadd.f32 %v503, %v504
        %vm506 = vcmask 24576
        %507 = vst.msk [vmem:[%s226] sm:$0x1] %vm506, %v505
        %v508 = vmul.f32 %v391, %v391
        %v509 = vmul.f32 %v394, %v394
        %v510 = vmul.f32 %v399, %v399
        %v511 = vmul.f32 %v402, %v402
        %v512 = vmul.f32 %v407, %v407
        %v513 = vmul.f32 %v410, %v410
        %v514 = vmul.f32 %v415, %v415
        %v515 = vmul.f32 %v418, %v418
        %v516 = vmul.f32 %v423, %v423
        %v517 = vmul.f32 %v426, %v426
        %v518 = vmul.f32 %v431, %v431
        %v519 = vmul.f32 %v434, %v434
        %v520 = vmul.f32 %v439, %v439
        %v521 = vmul.f32 %v442, %v442
        %v522 = vmul.f32 %v447, %v447
        %v523 = vmul.f32 %v450, %v450
        %v524 = vsel %vm327, %v508, 0.0
        %v525 = vsel %vm327, %v509, 0.0
        %v526 = vadd.f32 %v524, %v525
        %v527 = vsel %vm327, %v510, 0.0
        %v528 = vadd.f32 %v526, %v527
        %v529 = vsel %vm327, %v511, 0.0
        %v530 = vadd.f32 %v528, %v529
        %v531 = vsel %vm327, %v512, 0.0
        %v532 = vadd.f32 %v530, %v531
        %v533 = vsel %vm327, %v513, 0.0
        %v534 = vadd.f32 %v532, %v533
        %v535 = vsel %vm327, %v514, 0.0
        %v536 = vadd.f32 %v534, %v535
        %v537 = vsel %vm327, %v515, 0.0
        %v538 = vadd.f32 %v536, %v537
        %v539 = vsel %vm327, %v516, 0.0
        %v540 = vadd.f32 %v538, %v539
        %v541 = vsel %vm327, %v517, 0.0
        %v542 = vadd.f32 %v540, %v541
        %v543 = vsel %vm327, %v518, 0.0
        %v544 = vadd.f32 %v542, %v543
        %v545 = vsel %vm327, %v519, 0.0
        %v546 = vadd.f32 %v544, %v545
        %v547 = vsel %vm327, %v520, 0.0
        %v548 = vadd.f32 %v546, %v547
        %v549 = vsel %vm327, %v521, 0.0
        %v550 = vadd.f32 %v548, %v549
        %v551 = vsel %vm327, %v522, 0.0
        %v552 = vadd.f32 %v550, %v551
        %v553 = vsel %vm327, %v523, 0.0
        %v554 = vadd.f32 %v552, %v553
        %v555 = vrot.slane %v554, 4
        %v556 = vadd.f32 %v554, %v555
        %v557 = vrot.slane %v556, 2
        %v558 = vadd.f32 %v556, %v557
        %v559 = vrot.slane %v558, 1
        %v560 = vadd.f32 %v558, %v559
        %561 = vst.msk [vmem:[%s226 + $0x1] sm:$0x1] %vm506, %v560
        %s562 = smul.u32 16, %s20
        %p563 = scmp.lt.s32.totalorder %s562, 63
        %s564 = scalar_select %p563, %s562, 63
        %s565 = smul.addr %s564, 8
        %s566 = scalar_lea.vmem %s4, %s565
        %s567 = sand.u32 %s143, 1
        %s568 = scalar_lea.sflag [#allocation3], %s567
        %s569 = sand.u32 %s143, 1
        %s570 = smul.addr %s569, 2
        %s571 = scalar_lea.vmem [#allocation2], %s570
        // Predicated region
        $region37: #{tpu_custom_call.1} parent=35 // pred_check
          %p572 = pneg %p127
        $region38: #{tpu_custom_call.1} parent=35 // pred_check_branch
          %574 = sbr.rel (%p572) target = $region40
        $region39: #{tpu_custom_call.1} parent=35 // pred_region
          %s575 = smul.u32 16, %s20
        $region40: #{tpu_custom_call.1} parent=35 // pred_fallthru
          _
        // Predicated region
        $region41: #{tpu_custom_call.1} parent=35 // pred_check
          %p576 = pneg %p153
        $region42: #{tpu_custom_call.1} parent=35 // pred_check_branch
          %578 = sbr.rel (%p576) target = $region44
        $region43: #{tpu_custom_call.1} parent=35 // pred_region
          %s580 = ssub.s32 32, 32
          %581 = vsyncadd %s568, %s580
          %s582 = smul.addr %s20, 32
          %s583 = scalar_lea.hbm %s5, %s582
          %s585 = sshll.u32 %s571, 4
          %s586 = int_to_ptr.vmem [resolvable:$true] %s585
          %588 = dma.vmem_to_hbm [thread:$0]  %s586, 32, %s583, %s568
        $region44: #{tpu_custom_call.1} parent=35 // pred_fallthru
          _
      $region36: #{tpu_custom_call.1} parent=5 // pred_fallthru
        _
      %p589 = scmp.le.s32.totalorder 2, %s15
      // Predicated region
      $region45: #{tpu_custom_call.1} parent=5 // pred_check
        %p590 = pneg %p589
      $region46: #{tpu_custom_call.1} parent=5 // pred_check_branch
        %592 = sbr.rel (%p590) target = $region48
      $region47: #{tpu_custom_call.1} parent=5 // pred_region
        %s593 = ssub.s32 %s15, 2
        // Predicated region
        $region49: #{tpu_custom_call.1} parent=47 // pred_check
          %p594 = pneg %p133
        $region50: #{tpu_custom_call.1} parent=47 // pred_check_branch
          %596 = sbr.rel (%p594) target = $region52
        $region51: #{tpu_custom_call.1} parent=47 // pred_region
          %s597 = smul.u32 16, %s21
          %p598 = scmp.lt.s32.totalorder %s597, 63
          %s599 = scalar_select %p598, %s597, 63
          %s600 = smul.addr %s599, 8
          %s601 = scalar_lea.vmem %s4, %s600
        $region52: #{tpu_custom_call.1} parent=47 // pred_fallthru
          _
        // Predicated region
        $region53: #{tpu_custom_call.1} parent=47 // pred_check
          %p602 = pneg %p159
        $region54: #{tpu_custom_call.1} parent=47 // pred_check_branch
          %604 = sbr.rel (%p602) target = $region56
        $region55: #{tpu_custom_call.1} parent=47 // pred_region
          %s605 = sand.u32 %s144, 1
          %s606 = scalar_lea.sflag [#allocation3], %s605
          %s607 = sand.u32 %s144, 1
          %s608 = smul.addr %s607, 2
          %s609 = scalar_lea.vmem [#allocation2], %s608
          %610 = dma.done %s606, 32
        $region56: #{tpu_custom_call.1} parent=47 // pred_fallthru
          _
      $region48: #{tpu_custom_call.1} parent=5 // pred_fallthru
        _
    $region6: #{tpu_custom_call.1} parent=1 // loop_footer
      %s19 = sadd.s32 1, %s15
    $region7: #{tpu_custom_call.1} parent=1 // loop_footer_branch
      %14 = sbr.rel target = $region3
    $region8: #{tpu_custom_call.1} parent=1 // loop_exit
      _
    %611 = vsyncpa [#allocation3], 1
    %s612 = scalar_lea.sflag [#allocation3], 1
    %613 = vsyncpa %s612, 1

</llo_original>
